<compile_context>
chip_gen: v6e
topology: v6e:2x2x1
jax: 0.10.0
libtpu: 0.0.40
codegen_flags: <defaults>
</compile_context>

<pallas_src>
import jax
import jax.numpy as jnp
from jax.experimental import pallas as pl
from jax.experimental.pallas import tpu as pltpu


_LANES = 128
_SUBLANES = 8
_CHUNK = _SUBLANES * _LANES       # 1024 elements per (8,128) vreg tile
_TB_MAX = 512                     # max rows per grid step -> 2 MiB f32 per input tile


def _sse_partial_kernel(x_ref, y_ref, o_ref):
    # Tile shape (TB, 8, 128) -> per-tile (1, 8, 128) sum of squared errors.
    # Subtract in the input dtype (cheap on the VPU, exact for f32), then
    # square + accumulate in f32.  Mosaic fuses the elementwise ops into the
    # leading-axis reduction loop, so no large VMEM intermediates.
    d = (x_ref[...] - y_ref[...]).astype(jnp.float32)
    o_ref[...] = jnp.sum(d * d, axis=0, keepdims=True)


def integrate_loss(f_x, f_y, alpha=1.0, beta=0.3, gamma=0.2):
    """Pallas implementation of Integrate_Loss.forward -> alpha * MSE(f_x, f_y)."""
    assert f_x.shape == f_y.shape, "f_x / f_y must have identical shapes"
    n = int(f_x.size)
    assert n > 0

    # Lane-dense layout: flatten, zero-pad to a whole number of (tb, 8, 128)
    # tiles, reshape so the last two dims map exactly onto (sublane, lane).
    rows = pl.cdiv(n, _CHUNK)
    num_tiles = pl.cdiv(rows, _TB_MAX)
    tb = pl.cdiv(rows, num_tiles)          # balanced tiles -> minimal padding
    padded_rows = num_tiles * tb
    padded_n = padded_rows * _CHUNK

    xf = jnp.ravel(f_x)
    yf = jnp.ravel(f_y)
    if padded_n != n:
        pad = padded_n - n
        xf = jnp.pad(xf, (0, pad))
        yf = jnp.pad(yf, (0, pad))
    x3 = xf.reshape(padded_rows, _SUBLANES, _LANES)
    y3 = yf.reshape(padded_rows, _SUBLANES, _LANES)

    itemsize = int(jnp.dtype(x3.dtype).itemsize)
    cost = pl.CostEstimate(
        flops=3 * padded_n,                     # sub, mul, add per element
        transcendentals=0,
        bytes_accessed=2 * padded_n * itemsize + num_tiles * _CHUNK * 4,
    )

    partials = pl.pallas_call(
        _sse_partial_kernel,
        out_shape=jax.ShapeDtypeStruct((num_tiles, _SUBLANES, _LANES), jnp.float32),
        grid_spec=pltpu.PrefetchScalarGridSpec(
            num_scalar_prefetch=0,
            grid=(num_tiles,),
            in_specs=[
                pl.BlockSpec((tb, _SUBLANES, _LANES), lambda i: (i, 0, 0)),
                pl.BlockSpec((tb, _SUBLANES, _LANES), lambda i: (i, 0, 0)),
            ],
            out_specs=pl.BlockSpec((1, _SUBLANES, _LANES), lambda i: (i, 0, 0)),
        ),
        compiler_params=pltpu.CompilerParams(
            dimension_semantics=("parallel",),
        ),
        cost_estimate=cost,
    )(x3, y3)

    # Tiny final reduction over (num_tiles, 8, 128) partials + combined scale.
    sse = jnp.sum(partials)
    return sse * jnp.float32(float(alpha) / n)


def _reference(f_x, f_y, alpha=1.0):
    # Pure-JAX reference mirroring nn.MSELoss (mean reduction) * alpha.
    return alpha * jnp.mean((f_x.astype(jnp.float32) - f_y.astype(jnp.float32)) ** 2)


if __name__ == "__main__":
    key = jax.random.PRNGKey(0)

    # Case 1: small 2-D features, consistent with the module (batch, features).
    k1, k2, k3, k4 = jax.random.split(key, 4)
    B, D = 8, 32
    f_x = jax.random.normal(k1, (B, D), dtype=jnp.float32)
    f_y = jax.random.normal(k2, (B, D), dtype=jnp.float32)

    loss = jax.block_until_ready(integrate_loss(f_x, f_y, alpha=1.0))
    ref = _reference(f_x, f_y, alpha=1.0)
    assert jnp.allclose(loss, ref, rtol=1e-4, atol=1e-6), (loss, ref)

    # Case 2: exercises padding + multi-tile grid (balanced tiles) + alpha != 1.
    B2, D2 = 600, 1000
    g_x = jax.random.normal(k3, (B2, D2), dtype=jnp.float32)
    g_y = jax.random.normal(k4, (B2, D2), dtype=jnp.float32)

    loss2 = jax.block_until_ready(integrate_loss(g_x, g_y, alpha=0.5))
    ref2 = _reference(g_x, g_y, alpha=0.5)
    assert jnp.allclose(loss2, ref2, rtol=1e-4, atol=1e-6), (loss2, ref2)

    print("KERNEL_OK")
</pallas_src>

<mosaic_0001>
module attributes {stable_mosaic.version = 11 : i64} {
  func.func @_sse_partial_kernel(%arg0: i32, %arg1: memref<1x8x128xf32, #tpu.memory_space<vmem>>, %arg2: memref<1x8x128xf32, #tpu.memory_space<vmem>>, %arg3: memref<1x8x128xf32, #tpu.memory_space<vmem>>) attributes {dimension_semantics = [#tpu.dimension_semantics<parallel>], iteration_bounds = array<i64: 1>, scalar_prefetch = 0 : i64, scratch_operands = 0 : i64, tpu.core_type = #tpu.core_type<tc>, window_params = [{transform_indices = @transform_0, window_bounds = array<i64: 1, 8, 128>}, {transform_indices = @transform_1, window_bounds = array<i64: 1, 8, 128>}, {transform_indices = @transform_2, window_bounds = array<i64: 1, 8, 128>}]} {
    %c0 = arith.constant 0 : index
    %c0_0 = arith.constant 0 : index
    %c0_1 = arith.constant 0 : index
    %0 = vector.load %arg1[%c0, %c0_0, %c0_1] : memref<1x8x128xf32, #tpu.memory_space<vmem>>, vector<1x8x128xf32>
    %c0_2 = arith.constant 0 : index
    %c0_3 = arith.constant 0 : index
    %c0_4 = arith.constant 0 : index
    %1 = vector.load %arg2[%c0_2, %c0_3, %c0_4] : memref<1x8x128xf32, #tpu.memory_space<vmem>>, vector<1x8x128xf32>
    %2 = arith.subf %0, %1 : vector<1x8x128xf32>
    %3 = arith.mulf %2, %2 : vector<1x8x128xf32>
    %cst = arith.constant dense<0.000000e+00> : vector<8x128xf32>
    %4 = vector.multi_reduction <add>, %3, %cst [0] : vector<1x8x128xf32> to vector<8x128xf32>
    %5 = vector.shape_cast %4 : vector<8x128xf32> to vector<1x8x128xf32>
    %c0_5 = arith.constant 0 : index
    %c0_6 = arith.constant 0 : index
    %c0_7 = arith.constant 0 : index
    %6 = vector.load %arg3[%c0_5, %c0_6, %c0_7] : memref<1x8x128xf32, #tpu.memory_space<vmem>>, vector<1x8x128xf32>
    tpu.vector_store %arg3[%c0_5, %c0_6, %c0_7], %5 {strides = array<i32>} : memref<1x8x128xf32, #tpu.memory_space<vmem>>, vector<1x8x128xf32>,
    return
  }
  func.func @transform_0(%arg0: i32) -> (i32, i32, i32) {
    %c0_i32 = arith.constant 0 : i32
    %c0_i32_0 = arith.constant 0 : i32
    %c0_i32_1 = arith.constant 0 : i32
    return %arg0, %c0_i32, %c0_i32_0 : i32, i32, i32
  }
  func.func @transform_1(%arg0: i32) -> (i32, i32, i32) {
    %c0_i32 = arith.constant 0 : i32
    %c0_i32_0 = arith.constant 0 : i32
    %c0_i32_1 = arith.constant 0 : i32
    return %arg0, %c0_i32, %c0_i32_0 : i32, i32, i32
  }
  func.func @transform_2(%arg0: i32) -> (i32, i32, i32) {
    %c0_i32 = arith.constant 0 : i32
    %c0_i32_0 = arith.constant 0 : i32
    %c0_i32_1 = arith.constant 0 : i32
    return %arg0, %c0_i32, %c0_i32_0 : i32, i32, i32
  }
}

</mosaic_0001>

<llo_original>
// kernel: tpu_custom_call.1
$region0: #{tpu_custom_call.1}
  #allocation0 [shape = 'u32[]', space=smem, size = 0x4, offset = 0x4, fixed_abs, tag = 'smem constant byte address 0x4 - core index']
  #allocation1 [shape = 'u32[144,128]{1,0:T(1,128)}', space=vmem, size = 0x12000, scoped, tag = 'internal scratch']
  %s0 = inlined_call_operand.hbm [shape: f32[1,8,128], index: 0, kind: input, shape index: {}]
  %s1 = inlined_call_operand.hbm [shape: f32[1,8,128], index: 1, kind: input, shape index: {}]
  %s2 = inlined_call_operand.hbm [shape: f32[1,8,128], index: 2, kind: output, shape index: {}]
  %s3 = sld [smem:[#allocation0]]
  $region26: #{tpu_custom_call.1} parent=0
    _
  %s5 = ssub.s32 1, %s3
  %s6 = scalar_select 0, %s5, %s3
  $region1: #{tpu_custom_call.1} parent=0
    #allocation2 [shape = 'u8[4096]{0}', space=vmem, size = 0x1000, scoped, tag = 'input window, operand 0, single buffered']
    #allocation3 [shape = 's32[1]{0}', space=sflag, size = 0x4, scoped, tag = 'scoped memory for tpu_custom_call.1']
    #allocation4 [shape = 's32[1]{0}', space=sflag, size = 0x4, scoped, tag = 'scoped memory for tpu_custom_call.1']
    #allocation5 [shape = 'u8[4096]{0}', space=vmem, size = 0x1000, scoped, tag = 'input window, operand 1, single buffered']
    #allocation6 [shape = 's32[1]{0}', space=sflag, size = 0x4, scoped, tag = 'scoped memory for tpu_custom_call.1']
    #allocation7 [shape = 'u8[4096]{0}', space=vmem, size = 0x1000, scoped, tag = 'output window, operand 0, single buffered']
    %7 = vsyncpa [#allocation3], 0
    %8 = vsyncpa [#allocation6], 0
    %9 = vsyncpa [#allocation4], 0
    // Predicated region
    $region2: #{tpu_custom_call.1} parent=1 // pred_check
      _
    $region3: #{tpu_custom_call.1} parent=1 // pred_check_branch
      %11 = sbr.rel (0) target = $region5
    $region4: #{tpu_custom_call.1} parent=1 // pred_region
      %s13 = ssub.s32 128, 128
      %14 = vsyncadd [#allocation3], %s13
      %s16 = sshll.u32 [#allocation2], 4
      %s17 = int_to_ptr.vmem [resolvable:$true] %s16
      %19 = dma.hbm_to_vmem [thread:$0]  %s0, 128, %s17, [#allocation3]
    $region5: #{tpu_custom_call.1} parent=1 // pred_fallthru
      _
    // Predicated region
    $region6: #{tpu_custom_call.1} parent=1 // pred_check
      _
    $region7: #{tpu_custom_call.1} parent=1 // pred_check_branch
      %21 = sbr.rel (0) target = $region9
    $region8: #{tpu_custom_call.1} parent=1 // pred_region
      %s23 = ssub.s32 128, 128
      %24 = vsyncadd [#allocation6], %s23
      %s26 = sshll.u32 [#allocation5], 4
      %s27 = int_to_ptr.vmem [resolvable:$true] %s26
      %29 = dma.hbm_to_vmem [thread:$0]  %s1, 128, %s27, [#allocation6]
    $region9: #{tpu_custom_call.1} parent=1 // pred_fallthru
      _
    // Predicated region
    $region10: #{tpu_custom_call.1} parent=1 // pred_check
      _
    $region11: #{tpu_custom_call.1} parent=1 // pred_check_branch
      %31 = sbr.rel (0) target = $region13
    $region12: #{tpu_custom_call.1} parent=1 // pred_region
      %32 = dma.done [#allocation3], 128
    $region13: #{tpu_custom_call.1} parent=1 // pred_fallthru
      _
    // Predicated region
    $region14: #{tpu_custom_call.1} parent=1 // pred_check
      _
    $region15: #{tpu_custom_call.1} parent=1 // pred_check_branch
      %34 = sbr.rel (0) target = $region17
    $region16: #{tpu_custom_call.1} parent=1 // pred_region
      %35 = dma.done [#allocation6], 128
    $region17: #{tpu_custom_call.1} parent=1 // pred_fallthru
      _
    %v36 = vld [vmem:[#allocation2] sm:$0xff]
    %v37 = vld [vmem:[#allocation5] sm:$0xff]
    %v38 = vsub.f32 %v36, %v37
    %v39 = vmul.f32 %v38, %v38
    %v40 = vadd.f32 %v39, 0.0
    %41 = vst [vmem:[#allocation7] sm:$0xff] %v40
    // Predicated region
    $region18: #{tpu_custom_call.1} parent=1 // pred_check
      _
    $region19: #{tpu_custom_call.1} parent=1 // pred_check_branch
      %43 = sbr.rel (0) target = $region21
    $region20: #{tpu_custom_call.1} parent=1 // pred_region
      %s45 = ssub.s32 128, 128
      %46 = vsyncadd [#allocation4], %s45
      %s48 = sshll.u32 [#allocation7], 4
      %s49 = int_to_ptr.vmem [resolvable:$true] %s48
      %51 = dma.vmem_to_hbm [thread:$0]  %s49, 128, %s2, [#allocation4]
    $region21: #{tpu_custom_call.1} parent=1 // pred_fallthru
      _
    // Predicated region
    $region22: #{tpu_custom_call.1} parent=1 // pred_check
      _
    $region23: #{tpu_custom_call.1} parent=1 // pred_check_branch
      %53 = sbr.rel (0) target = $region25
    $region24: #{tpu_custom_call.1} parent=1 // pred_region
      %54 = dma.done [#allocation4], 128
    $region25: #{tpu_custom_call.1} parent=1 // pred_fallthru
      _
    %55 = vsyncpa [#allocation3], 1
    %56 = vsyncpa [#allocation6], 1
    %57 = vsyncpa [#allocation4], 1

</llo_original>
